<compile_context>
chip_gen: v6e
topology: v6e:2x2x1
jax: 0.10.0
libtpu: 0.0.40
codegen_flags: <defaults>
</compile_context>

<pallas_src>
import functools

import jax
import jax.numpy as jnp
from jax import lax
from jax.experimental import pallas as pl
from jax.experimental.pallas import tpu as pltpu

EMBED_DIM = 512
FFN_DIM = 512           # TODO(synk): real StyTr2 uses dim_feedforward=2048
NHEAD = 8
D_HEAD = EMBED_DIM // NHEAD
PATCH = 8


def _round_up(x, m):
    return ((x + m - 1) // m) * m


def _pick_tile(n, cap):
    """Largest tile <= cap dividing n (multiple of 8 unless it is the full dim)."""
    if n <= cap:
        return n
    for d in range(cap, 7, -1):
        if n % d == 0 and d % 8 == 0:
            return d
    return n


# ----------------------------------------------------------------------------
# Matmul (+bias, +relu) kernel
# ----------------------------------------------------------------------------
def _matmul_kernel(a_ref, b_ref, bias_ref, o_ref, acc_ref, *, relu):
    k = pl.program_id(2)

    @pl.when(k == 0)
    def _():
        acc_ref[...] = jnp.zeros_like(acc_ref)

    acc_ref[...] += jnp.dot(a_ref[...], b_ref[...],
                            preferred_element_type=jnp.float32)

    @pl.when(k == pl.num_programs(2) - 1)
    def _():
        out = acc_ref[...] + bias_ref[...]
        if relu:
            out = jnp.maximum(out, 0.0)
        o_ref[...] = out.astype(o_ref.dtype)


def matmul_bias(a, b, bias, relu=False, out_dtype=jnp.bfloat16):
    """out = act(a @ b + bias); bf16 operands, f32 accumulation."""
    M, K = a.shape
    N = b.shape[1]
    a = a.astype(jnp.bfloat16)
    b = b.astype(jnp.bfloat16)
    TM = 512 if M >= 512 else _round_up(M, 8)
    TK = 512 if K >= 512 else _round_up(K, 128)
    TN = 512 if N >= 512 else _round_up(N, 128)
    Mp, Kp, Np = _round_up(M, TM), _round_up(K, TK), _round_up(N, TN)
    if (Mp, Kp) != (M, K):
        a = jnp.pad(a, ((0, Mp - M), (0, Kp - K)))
    if (Kp, Np) != (K, N):
        b = jnp.pad(b, ((0, Kp - K), (0, Np - N)))
    bias2 = jnp.asarray(bias, jnp.float32).reshape(1, -1)
    if Np != N:
        bias2 = jnp.pad(bias2, ((0, 0), (0, Np - N)))
    grid = (Mp // TM, Np // TN, Kp // TK)
    out = pl.pallas_call(
        functools.partial(_matmul_kernel, relu=relu),
        out_shape=jax.ShapeDtypeStruct((Mp, Np), out_dtype),
        grid_spec=pltpu.PrefetchScalarGridSpec(
            num_scalar_prefetch=0,
            grid=grid,
            in_specs=[
                pl.BlockSpec((TM, TK), lambda i, j, k: (i, k)),
                pl.BlockSpec((TK, TN), lambda i, j, k: (k, j)),
                pl.BlockSpec((1, TN), lambda i, j, k: (0, j)),
            ],
            out_specs=pl.BlockSpec((TM, TN), lambda i, j, k: (i, j)),
            scratch_shapes=[pltpu.VMEM((TM, TN), jnp.float32)],
        ),
        compiler_params=pltpu.CompilerParams(
            dimension_semantics=("parallel", "parallel", "arbitrary")),
    )(a, b, bias2)
    if (Mp, Np) != (M, N):
        out = out[:M, :N]
    return out


# ----------------------------------------------------------------------------
# 3x3 conv (reflection pad 1), NHWC, multi-row blocks, dx folded into K
# ----------------------------------------------------------------------------
def _conv3x3_kernel(xm_ref, xh_ref, w_ref, b_ref, o_ref, *, relu):
    # xm_ref: (1, R, W+2, C) rows [h*R, h*R+R) of the padded input
    # xh_ref: (1, R, W+2, C) rows [h*R+R, ...) -- only the first 2 rows used
    # w_ref : (3, 3*C, Cout) dy-major, dx folded into the contraction dim
    R = o_ref.shape[1]
    W = o_ref.shape[2]
    Cout = o_ref.shape[3]
    bias = b_ref[...]                                   # (1, Cout) f32

    def folded_row(i):
        row = xm_ref[0, i] if i < R else xh_ref[0, i - R]    # (W+2, C)
        return jnp.concatenate(
            [row[0:W], row[1:W + 1], row[2:W + 2]], axis=-1)  # (W, 3C)

    rows = [folded_row(i) for i in range(R + 2)]
    for r in range(R):
        acc = jnp.zeros((W, Cout), jnp.float32)
        for dy in range(3):
            acc = acc + jnp.dot(rows[r + dy], w_ref[dy],
                                preferred_element_type=jnp.float32)
        out = acc + bias
        if relu:
            out = jnp.maximum(out, 0.0)
        o_ref[0, r] = out.astype(o_ref.dtype)


def conv3x3_reflect(x, w_packed, b, relu):
    """3x3 conv with reflection padding 1; R output rows per grid step."""
    N, H, W, C = x.shape
    Cout = w_packed.shape[2]
    Wp = W + 2
    row_bytes = Wp * C * 2
    rmax = max(2, min(8, (1 << 20) // max(row_bytes, 1)))
    R = H
    for d in range(min(rmax, H), 1, -1):
        if H % d == 0:
            R = d
            break
    # TODO(synk): R==1 (H==1) would need a third halo stream; never hit here.
    Hb = H // R
    xp = jnp.pad(x.astype(jnp.bfloat16), ((0, 0), (1, 1), (1, 1), (0, 0)),
                 mode="reflect")
    if R > 2:
        xp = jnp.pad(xp, ((0, 0), (0, R - 2), (0, 0), (0, 0)))   # rows: H + R
    return pl.pallas_call(
        functools.partial(_conv3x3_kernel, relu=relu),
        out_shape=jax.ShapeDtypeStruct((N, H, W, Cout), jnp.bfloat16),
        grid_spec=pltpu.PrefetchScalarGridSpec(
            num_scalar_prefetch=0,
            grid=(N, Hb),
            in_specs=[
                pl.BlockSpec((1, R, Wp, C), lambda n, h: (n, h, 0, 0)),
                pl.BlockSpec((1, R, Wp, C), lambda n, h: (n, h + 1, 0, 0)),
                pl.BlockSpec((3, 3 * C, Cout), lambda n, h: (0, 0, 0)),
                pl.BlockSpec((1, Cout), lambda n, h: (0, 0)),
            ],
            out_specs=pl.BlockSpec((1, R, W, Cout), lambda n, h: (n, h, 0, 0)),
        ),
        compiler_params=pltpu.CompilerParams(
            dimension_semantics=("parallel", "parallel"),
            vmem_limit_bytes=32 * 1024 * 1024),
    )(xp, xp, w_packed, jnp.asarray(b, jnp.float32).reshape(1, -1))


# ----------------------------------------------------------------------------
# Flash-style multi-head attention on (B, T, 512) -- heads sliced in-kernel
# ----------------------------------------------------------------------------
def _flash_attn_kernel(q_ref, k_ref, v_ref, o_ref, m_sc, l_sc, acc_sc,
                       *, scale, nhead, dh):
    kv = pl.program_id(2)

    @pl.when(kv == 0)
    def _():
        m_sc[...] = jnp.full_like(m_sc, -1e30)
        l_sc[...] = jnp.zeros_like(l_sc)
        acc_sc[...] = jnp.zeros_like(acc_sc)

    q = q_ref[0]                                        # (tq, D) bf16
    k = k_ref[0]                                        # (tk, D)
    v = v_ref[0]
    for h in range(nhead):
        lo = h * dh
        qh = q[:, lo:lo + dh]
        kh = k[:, lo:lo + dh]
        vh = v[:, lo:lo + dh]
        s = lax.dot_general(qh, kh, (((1,), (1,)), ((), ())),
                            preferred_element_type=jnp.float32) * scale
        m_prev = m_sc[h]                                # (tq, 1)
        m_new = jnp.maximum(m_prev, jnp.max(s, axis=-1, keepdims=True))
        alpha = jnp.exp(m_prev - m_new)
        p = jnp.exp(s - m_new)
        l_sc[h] = alpha * l_sc[h] + jnp.sum(p, axis=-1, keepdims=True)
        acc_sc[h] = alpha * acc_sc[h] + jnp.dot(
            p.astype(vh.dtype), vh, preferred_element_type=jnp.float32)
        m_sc[h] = m_new

    @pl.when(kv == pl.num_programs(2) - 1)
    def _():
        parts = []
        for h in range(nhead):
            inv = pl.reciprocal(l_sc[h], approx=True)   # deferred softmax norm
            parts.append(acc_sc[h] * inv)
        o_ref[0] = jnp.concatenate(parts, axis=-1).astype(o_ref.dtype)


def flash_attention(q, k, v):
    """q,k,v: (B, T, EMBED_DIM) projections; returns (B, Tq, EMBED_DIM)."""
    B, Tq, D = q.shape
    Tk = k.shape[1]
    q = q.astype(jnp.bfloat16)
    k = k.astype(jnp.bfloat16)
    v = v.astype(jnp.bfloat16)
    tq = _pick_tile(Tq, 256)
    tk = _pick_tile(Tk, 512)
    scale = 1.0 / float(D_HEAD) ** 0.5
    return pl.pallas_call(
        functools.partial(_flash_attn_kernel, scale=scale,
                          nhead=NHEAD, dh=D_HEAD),
        out_shape=jax.ShapeDtypeStruct((B, Tq, D), jnp.bfloat16),
        grid_spec=pltpu.PrefetchScalarGridSpec(
            num_scalar_prefetch=0,
            grid=(B, Tq // tq, Tk // tk),
            in_specs=[
                pl.BlockSpec((1, tq, D), lambda b, i, j: (b, i, 0)),
                pl.BlockSpec((1, tk, D), lambda b, i, j: (b, j, 0)),
                pl.BlockSpec((1, tk, D), lambda b, i, j: (b, j, 0)),
            ],
            out_specs=pl.BlockSpec((1, tq, D), lambda b, i, j: (b, i, 0)),
            scratch_shapes=[pltpu.VMEM((NHEAD, tq, 1), jnp.float32),
                            pltpu.VMEM((NHEAD, tq, 1), jnp.float32),
                            pltpu.VMEM((NHEAD, tq, D_HEAD), jnp.float32)],
        ),
        compiler_params=pltpu.CompilerParams(
            dimension_semantics=("parallel", "parallel", "arbitrary")),
    )(q, k, v)


# ----------------------------------------------------------------------------
# Loss kernels: per-channel mean/std on NHWC, fused normalized-MSE, tiled MSE
# ----------------------------------------------------------------------------
def _chan_stats_kernel(x_ref, mean_ref, std_ref, *, hw, eps):
    j = pl.program_id(1)

    @pl.when(j == 0)
    def _():
        mean_ref[...] = jnp.zeros_like(mean_ref)
        std_ref[...] = jnp.zeros_like(std_ref)

    x = x_ref[...].astype(jnp.float32)                  # (1, hwb, C)
    mean_ref[...] += jnp.sum(x, axis=1, keepdims=True)
    std_ref[...] += jnp.sum(x * x, axis=1, keepdims=True)

    @pl.when(j == pl.num_programs(1) - 1)
    def _():
        s = mean_ref[...]
        sq = std_ref[...]
        mean = s * (1.0 / hw)
        denom = max(hw - 1, 1)                          # unbiased (torch.var)
        var = (sq - s * mean) * (1.0 / denom)
        mean_ref[...] = mean
        std_ref[...] = jnp.sqrt(jnp.maximum(var, 0.0) + eps)


def channel_stats(feat):
    """calc_mean_std on an NHWC feature map; returns (N,1,C) mean and std."""
    N, H, W, C = feat.shape
    HW = H * W
    x = feat.reshape(N, HW, C).astype(jnp.bfloat16)
    hwb = _pick_tile(HW, 1024)
    mean, std = pl.pallas_call(
        functools.partial(_chan_stats_kernel, hw=HW, eps=1e-5),
        out_shape=(jax.ShapeDtypeStruct((N, 1, C), jnp.float32),
                   jax.ShapeDtypeStruct((N, 1, C), jnp.float32)),
        grid_spec=pltpu.PrefetchScalarGridSpec(
            num_scalar_prefetch=0,
            grid=(N, HW // hwb),
            in_specs=[pl.BlockSpec((1, hwb, C), lambda n, j: (n, j, 0))],
            out_specs=[pl.BlockSpec((1, 1, C), lambda n, j: (n, 0, 0)),
                       pl.BlockSpec((1, 1, C), lambda n, j: (n, 0, 0))],
        ),
        compiler_params=pltpu.CompilerParams(
            dimension_semantics=("parallel", "arbitrary")),
    )(x)
    return mean, std


def _norm_mse_kernel(a_ref, am_ref, as_ref, b_ref, bm_ref, bs_ref, o_ref):
    a = a_ref[...].astype(jnp.float32)
    b = b_ref[...].astype(jnp.float32)
    na = (a - am_ref[...]) * (1.0 / as_ref[...])
    nb = (b - bm_ref[...]) * (1.0 / bs_ref[...])
    d = na - nb
    o_ref[...] = jnp.sum(d * d, axis=2, keepdims=True)   # (1, hwb, 1)


def normalized_mse(x, y):
    """mse(normal(x), normal(y)) with no normalized maps written to HBM."""
    xm, xs = channel_stats(x)
    ym, ys = channel_stats(y)
    N, H, W, C = x.shape
    HW = H * W
    xt = x.reshape(N, HW, C).astype(jnp.bfloat16)
    yt = y.reshape(N, HW, C).astype(jnp.bfloat16)
    hwb = _pick_tile(HW, 1024)
    stat_spec = pl.BlockSpec((1, 1, C), lambda n, j: (n, 0, 0))
    map_spec = pl.BlockSpec((1, hwb, C), lambda n, j: (n, j, 0))
    partial = pl.pallas_call(
        _norm_mse_kernel,
        out_shape=jax.ShapeDtypeStruct((N, HW, 1), jnp.float32),
        grid_spec=pltpu.PrefetchScalarGridSpec(
            num_scalar_prefetch=0,
            grid=(N, HW // hwb),
            in_specs=[map_spec, stat_spec, stat_spec,
                      map_spec, stat_spec, stat_spec],
            out_specs=pl.BlockSpec((1, hwb, 1), lambda n, j: (n, j, 0)),
        ),
        compiler_params=pltpu.CompilerParams(
            dimension_semantics=("parallel", "parallel")),
    )(xt, xm, xs, yt, ym, ys)
    return jnp.sum(partial) / (N * HW * C)


def _mse_partial_kernel(a_ref, b_ref, o_ref):
    d = a_ref[...].astype(jnp.float32) - b_ref[...].astype(jnp.float32)
    o_ref[...] = jnp.sum(d * d, axis=1, keepdims=True)


def mse(a, b):
    """nn.MSELoss (mean over all elements); per-block partial sums."""
    a = a.reshape(-1)
    b = b.reshape(-1)
    n = a.shape[0]
    rows = -(-n // 128)
    rb = min(2048, _round_up(rows, 8))
    rows_p = _round_up(rows, rb)
    pad = rows_p * 128 - n
    if pad:
        a = jnp.pad(a, (0, pad))
        b = jnp.pad(b, (0, pad))
    a2 = a.reshape(rows_p, 128)
    b2 = b.reshape(rows_p, 128)
    partial = pl.pallas_call(
        _mse_partial_kernel,
        out_shape=jax.ShapeDtypeStruct((rows_p, 1), jnp.float32),
        grid_spec=pltpu.PrefetchScalarGridSpec(
            num_scalar_prefetch=0,
            grid=(rows_p // rb,),
            in_specs=[pl.BlockSpec((rb, 128), lambda i: (i, 0)),
                      pl.BlockSpec((rb, 128), lambda i: (i, 0))],
            out_specs=pl.BlockSpec((rb, 1), lambda i: (i, 0)),
        ),
        compiler_params=pltpu.CompilerParams(
            dimension_semantics=("parallel",)),
    )(a2, b2)
    return jnp.sum(partial) / n


def calc_style_loss(x, y):
    xm, xs = channel_stats(x)
    ym, ys = channel_stats(y)
    return jnp.mean((xm - ym) ** 2) + jnp.mean((xs - ys) ** 2)


# ----------------------------------------------------------------------------
# Plain-JAX glue (NHWC)
# ----------------------------------------------------------------------------
def conv1x1(x, w, b, relu):
    N, H, W, C = x.shape
    out = matmul_bias(x.reshape(N * H * W, C), w, b, relu=relu)
    return out.reshape(N, H, W, -1)


def maxpool2(x):
    N, H, W, C = x.shape
    return x.reshape(N, H // 2, 2, W // 2, 2, C).max(axis=(2, 4))


def upsample2(x):
    N, H, W, C = x.shape
    x = jnp.broadcast_to(x[:, :, None, :, None, :], (N, H, 2, W, 2, C))
    return x.reshape(N, 2 * H, 2 * W, C)


def layer_norm(x, eps=1e-5):
    # TODO(synk): no learnable gamma/beta (deterministic init gamma=1, beta=0)
    xf = x.astype(jnp.float32)
    mu = jnp.mean(xf, axis=-1, keepdims=True)
    var = jnp.mean((xf - mu) ** 2, axis=-1, keepdims=True)
    return ((xf - mu) / jnp.sqrt(var + eps)).astype(x.dtype)


# ----------------------------------------------------------------------------
# Network definitions (VGG encoder stages, decoder, patch-embed, transformer)
# ----------------------------------------------------------------------------
ENC_STAGES = [
    [("c1", 3, 3, False), ("c3", 3, 64, True)],                               # relu1_1
    [("c3", 64, 64, True), ("pool",), ("c3", 64, 128, True)],                 # relu2_1
    [("c3", 128, 128, True), ("pool",), ("c3", 128, 256, True)],              # relu3_1
    [("c3", 256, 256, True), ("c3", 256, 256, True), ("c3", 256, 256, True),
     ("pool",), ("c3", 256, 512, True)],                                      # relu4_1
    [("c3", 512, 512, True), ("c3", 512, 512, True), ("c3", 512, 512, True),
     ("pool",), ("c3", 512, 512, True)],                                      # relu5_1
]

DEC_LAYERS = [
    ("c3", 512, 256, True), ("up",),
    ("c3", 256, 256, True), ("c3", 256, 256, True), ("c3", 256, 256, True),
    ("c3", 256, 128, True), ("up",),
    ("c3", 128, 128, True), ("c3", 128, 64, True), ("up",),
    ("c3", 64, 64, True), ("c3", 64, 3, False),
]


def init_params(key):
    """Weights pre-packed once: conv3 -> (3, 3*Cin, Cout) bf16, linear (K,N)."""
    keys = iter(jax.random.split(key, 128))

    def conv3_p(cin, cout):
        w = jax.random.normal(next(keys), (3, 3, cin, cout), jnp.float32)
        w = w * (2.0 / (cin * 9)) ** 0.5
        w = w.reshape(3, 3 * cin, cout)                 # dx folded into K
        return {"w": w.astype(jnp.bfloat16), "b": jnp.zeros((cout,), jnp.float32)}

    def mat_p(din, dout, scale):
        w = jax.random.normal(next(keys), (din, dout), jnp.float32) * scale
        return {"w": w.astype(jnp.bfloat16), "b": jnp.zeros((dout,), jnp.float32)}

    def lin_p(din, dout):
        return mat_p(din, dout, din ** -0.5)

    def mha_p():
        return {"q": lin_p(EMBED_DIM, EMBED_DIM), "k": lin_p(EMBED_DIM, EMBED_DIM),
                "v": lin_p(EMBED_DIM, EMBED_DIM), "o": lin_p(EMBED_DIM, EMBED_DIM)}

    enc = []
    for stage in ENC_STAGES:
        ps = []
        for op in stage:
            if op[0] == "c1":
                ps.append(mat_p(op[1], op[2], (2.0 / op[1]) ** 0.5))
            elif op[0] == "c3":
                ps.append(conv3_p(op[1], op[2]))
        enc.append(ps)
    dec = [conv3_p(op[1], op[2]) for op in DEC_LAYERS if op[0] == "c3"]
    embed = mat_p(PATCH * PATCH * 3, EMBED_DIM, (2.0 / (PATCH * PATCH * 3)) ** 0.5)
    trans = {
        "enc": {"self": mha_p(),
                "ffn1": lin_p(EMBED_DIM, FFN_DIM), "ffn2": lin_p(FFN_DIM, EMBED_DIM)},
        "dec": {"self": mha_p(), "cross": mha_p(),
                "ffn1": lin_p(EMBED_DIM, FFN_DIM), "ffn2": lin_p(FFN_DIM, EMBED_DIM)},
    }
    return {"enc": enc, "dec": dec, "embed": embed, "trans": trans}


def run_stage(stage, stage_params, x):
    pi = 0
    for op in stage:
        if op[0] == "pool":
            x = maxpool2(x)
        else:
            p = stage_params[pi]
            pi += 1
            if op[0] == "c1":
                x = conv1x1(x, p["w"], p["b"], relu=op[3])
            else:
                x = conv3x3_reflect(x, p["w"], p["b"], relu=op[3])
    return x


@jax.jit
def _encode(enc_params, x):
    feats = []
    for stage, sp in zip(ENC_STAGES, enc_params):
        x = run_stage(stage, sp, x)
        feats.append(x)
    return feats


@jax.jit
def _decode(dec_params, x):
    pi = 0
    for op in DEC_LAYERS:
        if op[0] == "up":
            x = upsample2(x)
        else:
            p = dec_params[pi]
            pi += 1
            x = conv3x3_reflect(x, p["w"], p["b"], relu=op[3])
    return x


@jax.jit
def _patch_embed(p, x):
    N, H, W, C = x.shape
    h, w = H // PATCH, W // PATCH
    a = (x.reshape(N, h, PATCH, w, PATCH, C)
          .transpose(0, 1, 3, 2, 4, 5)
          .reshape(N * h * w, PATCH * PATCH * C))
    out = matmul_bias(a, p["w"], p["b"], relu=False)
    return out.reshape(N, h, w, EMBED_DIM)


def linear(p, x, relu=False):
    shp = x.shape
    out = matmul_bias(x.reshape(-1, shp[-1]), p["w"], p["b"], relu=relu)
    return out.reshape(shp[:-1] + (p["w"].shape[1],))


def mha(p, q_in, k_in, v_in):
    q = linear(p["q"], q_in)
    k = linear(p["k"], k_in)
    v = linear(p["v"], v_in)
    o = flash_attention(q, k, v)        # heads handled inside the kernel
    return linear(p["o"], o)


def encoder_layer(p, src, pos):
    q = src + pos
    src2 = mha(p["self"], q, q, src)
    src = layer_norm(src + src2)
    ff = linear(p["ffn2"], linear(p["ffn1"], src, relu=True))
    return layer_norm(src + ff)


def decoder_layer(p, tgt, memory, query_pos, pos):
    q = tgt + query_pos
    tgt2 = mha(p["self"], q, q, tgt)
    tgt = layer_norm(tgt + tgt2)
    tgt2 = mha(p["cross"], tgt + query_pos, memory + pos, memory)
    tgt = layer_norm(tgt + tgt2)
    ff = linear(p["ffn2"], linear(p["ffn1"], tgt, relu=True))
    return layer_norm(tgt + ff)


@jax.jit
def _transform(p, style, content, pos_c, pos_s):
    # pos_c / pos_s are zero arrays when the original passes None (same math).
    B, h, w, C = style.shape
    tok = lambda t: t.reshape(B, h * w, C)
    memory = encoder_layer(p["enc"], tok(style), tok(pos_s))
    out = decoder_layer(p["dec"], tok(content), memory, tok(pos_c), tok(pos_s))
    return out.reshape(B, h, w, C)


@jax.jit
def _losses(content_feats, style_feats, Ics_feats, Icc_feats, Iss_feats,
            Icc, Iss, content_in, style_in):
    loss_c = (normalized_mse(Ics_feats[-1], content_feats[-1]) +
              normalized_mse(Ics_feats[-2], content_feats[-2]))
    loss_s = calc_style_loss(Ics_feats[0], style_feats[0])
    for i in range(1, 5):
        loss_s = loss_s + calc_style_loss(Ics_feats[i], style_feats[i])
    loss_l1 = mse(Icc, content_in) + mse(Iss, style_in)
    loss_l2 = (mse(Icc_feats[0], content_feats[0]) +
               mse(Iss_feats[0], style_feats[0]))
    for i in range(1, 5):
        loss_l2 = (loss_l2 +
                   mse(Icc_feats[i], content_feats[i]) +
                   mse(Iss_feats[i], style_feats[i]))
    return loss_c, loss_s, loss_l1, loss_l2


# ----------------------------------------------------------------------------
# StyTrans forward
# ----------------------------------------------------------------------------
def sty_trans_forward(params, samples_c, samples_s):
    content_nhwc = jnp.transpose(samples_c, (0, 2, 3, 1))
    style_nhwc = jnp.transpose(samples_s, (0, 2, 3, 1))
    content_bf = content_nhwc.astype(jnp.bfloat16)
    style_bf = style_nhwc.astype(jnp.bfloat16)

    style = _patch_embed(params["embed"], style_bf)
    content = _patch_embed(params["embed"], content_bf)
    zeros = jnp.zeros_like(content)          # stands in for pos = None

    if samples_c.shape[-1] == samples_c.shape[-2]:
        # nested_tensor_from_tensor_list is a no-op here (square, unmasked)
        content_feats = _encode(params["enc"], content_bf)
        style_feats = _encode(params["enc"], style_bf)
        # pos_s = None, pos_c = content, mask = None
        hs = _transform(params["trans"], style, content, content, zeros)
        Ics = _decode(params["dec"], hs)
        Ics_feats = _encode(params["enc"], Ics)
        Icc = _decode(params["dec"],
                      _transform(params["trans"], content, content, content, content))
        Iss = _decode(params["dec"],
                      _transform(params["trans"], style, style, zeros, zeros))
        Icc_feats = _encode(params["enc"], Icc)
        Iss_feats = _encode(params["enc"], Iss)
        loss_c, loss_s, loss_l1, loss_l2 = _losses(
            content_feats, style_feats, Ics_feats, Icc_feats, Iss_feats,
            Icc, Iss, content_nhwc, style_nhwc)
        Ics_out = jnp.transpose(Ics, (0, 3, 1, 2)).astype(jnp.float32)
        return Ics_out, loss_c, loss_s, loss_l1, loss_l2
    else:
        hs = _transform(params["trans"], style, content, content, zeros)
        Ics = _decode(params["dec"], hs)
        return jnp.transpose(Ics, (0, 3, 1, 2)).astype(jnp.float32), hs


# ----------------------------------------------------------------------------
if __name__ == "__main__":
    key = jax.random.PRNGKey(0)
    kp, kc, ks = jax.random.split(key, 3)
    params = init_params(kp)

    B, H, W = 2, 32, 32      # small but valid: H/16 >= 2 so enc_5 stats exist
    samples_c = jax.random.uniform(kc, (B, 3, H, W), jnp.float32)
    samples_s = jax.random.uniform(ks, (B, 3, H, W), jnp.float32)

    outs = sty_trans_forward(params, samples_c, samples_s)
    outs = jax.block_until_ready(outs)
    Ics = outs[0]
    assert Ics.shape == (B, 3, H, W)
    assert len(outs) == 5
    print("KERNEL_OK")
</pallas_src>

<mosaic_0001>
module attributes {stable_mosaic.version = 11 : i64} {
  func.func @_matmul_kernel(%arg0: i32, %arg1: i32, %arg2: i32, %arg3: memref<32x256xbf16, #tpu.memory_space<vmem>>, %arg4: memref<256x512xbf16, #tpu.memory_space<vmem>>, %arg5: memref<1x512xf32, #tpu.memory_space<vmem>>, %arg6: memref<32x512xbf16, #tpu.memory_space<vmem>>, %arg7: memref<32x512xf32, #tpu.memory_space<vmem>>) attributes {dimension_semantics = [#tpu.dimension_semantics<parallel>, #tpu.dimension_semantics<parallel>, #tpu.dimension_semantics<arbitrary>], iteration_bounds = array<i64: 1, 1, 1>, scalar_prefetch = 0 : i64, scratch_operands = 1 : i64, tpu.core_type = #tpu.core_type<tc>, window_params = [{transform_indices = @transform_0, window_bounds = array<i64: 32, 256>}, {transform_indices = @transform_1, window_bounds = array<i64: 256, 512>}, {transform_indices = @transform_2, window_bounds = array<i64: 1, 512>}, {transform_indices = @transform_3, window_bounds = array<i64: 32, 512>}]} {
    %c0_i32 = arith.constant 0 : i32
    %0 = arith.cmpi eq, %arg2, %c0_i32 : i32
    %1 = arith.extui %0 : i1 to i32
    %c0_i32_0 = arith.constant 0 : i32
    %2 = arith.cmpi ne, %1, %c0_i32_0 : i32
    scf.if %2 {
      %cst_10 = arith.constant 0.000000e+00 : f32
      %12 = vector.broadcast %cst_10 : f32 to vector<32x512xf32>
      %c0_11 = arith.constant 0 : index
      %c0_12 = arith.constant 0 : index
      %13 = vector.load %arg7[%c0_11, %c0_12] : memref<32x512xf32, #tpu.memory_space<vmem>>, vector<32x512xf32>
      tpu.vector_store %arg7[%c0_11, %c0_12], %12 {strides = array<i32>} : memref<32x512xf32, #tpu.memory_space<vmem>>, vector<32x512xf32>,
    } else {
    }
    %c0 = arith.constant 0 : index
    %c0_1 = arith.constant 0 : index
    %3 = vector.load %arg7[%c0, %c0_1] : memref<32x512xf32, #tpu.memory_space<vmem>>, vector<32x512xf32>
    %c0_2 = arith.constant 0 : index
    %c0_3 = arith.constant 0 : index
    %4 = vector.load %arg3[%c0_2, %c0_3] : memref<32x256xbf16, #tpu.memory_space<vmem>>, vector<32x256xbf16>
    %c0_4 = arith.constant 0 : index
    %c0_5 = arith.constant 0 : index
    %5 = vector.load %arg4[%c0_4, %c0_5] : memref<256x512xbf16, #tpu.memory_space<vmem>>, vector<256x512xbf16>
    %cst = arith.constant dense<0.000000e+00> : vector<32x512xf32>
    %6 = tpu.matmul %4, %5, %cst {dimension_numbers = #tpu.dot_dimension_numbers<[1], [0], [0], [1], [0, 0, 1, 1], [], []>} : vector<32x256xbf16>, vector<256x512xbf16>, vector<32x512xf32> -> vector<32x512xf32>
    %7 = arith.addf %3, %6 : vector<32x512xf32>
    %c0_6 = arith.constant 0 : index
    %c0_7 = arith.constant 0 : index
    %8 = vector.load %arg7[%c0_6, %c0_7] : memref<32x512xf32, #tpu.memory_space<vmem>>, vector<32x512xf32>
    tpu.vector_store %arg7[%c0_6, %c0_7], %7 {strides = array<i32>} : memref<32x512xf32, #tpu.memory_space<vmem>>, vector<32x512xf32>,
    %c0_i32_8 = arith.constant 0 : i32
    %9 = arith.cmpi eq, %arg2, %c0_i32_8 : i32
    %10 = arith.extui %9 : i1 to i32
    %c0_i32_9 = arith.constant 0 : i32
    %11 = arith.cmpi ne, %10, %c0_i32_9 : i32
    scf.if %11 {
      %c0_10 = arith.constant 0 : index
      %c0_11 = arith.constant 0 : index
      %12 = vector.load %arg7[%c0_10, %c0_11] : memref<32x512xf32, #tpu.memory_space<vmem>>, vector<32x512xf32>
      %c0_12 = arith.constant 0 : index
      %c0_13 = arith.constant 0 : index
      %13 = vector.load %arg5[%c0_12, %c0_13] : memref<1x512xf32, #tpu.memory_space<vmem>>, vector<1x512xf32>
      %14 = vector.broadcast %13 : vector<1x512xf32> to vector<32x512xf32>
      %15 = arith.addf %12, %14 : vector<32x512xf32>
      %16 = arith.truncf %15 : vector<32x512xf32> to vector<32x512xbf16>
      %c0_14 = arith.constant 0 : index
      %c0_15 = arith.constant 0 : index
      %17 = vector.load %arg6[%c0_14, %c0_15] : memref<32x512xbf16, #tpu.memory_space<vmem>>, vector<32x512xbf16>
      tpu.vector_store %arg6[%c0_14, %c0_15], %16 {strides = array<i32>} : memref<32x512xbf16, #tpu.memory_space<vmem>>, vector<32x512xbf16>,
    } else {
    }
    return
  }
  func.func @transform_0(%arg0: i32, %arg1: i32, %arg2: i32) -> (i32, i32) {
    %c0_i32 = arith.constant 0 : i32
    return %arg0, %arg2 : i32, i32
  }
  func.func @transform_1(%arg0: i32, %arg1: i32, %arg2: i32) -> (i32, i32) {
    %c0_i32 = arith.constant 0 : i32
    return %arg2, %arg1 : i32, i32
  }
  func.func @transform_2(%arg0: i32, %arg1: i32, %arg2: i32) -> (i32, i32) {
    %c0_i32 = arith.constant 0 : i32
    %c0_i32_0 = arith.constant 0 : i32
    return %c0_i32, %arg1 : i32, i32
  }
  func.func @transform_3(%arg0: i32, %arg1: i32, %arg2: i32) -> (i32, i32) {
    %c0_i32 = arith.constant 0 : i32
    return %arg0, %arg1 : i32, i32
  }
}

</mosaic_0001>

<llo_original>
// kernel: _patch_embed.1
$region0: #{_patch_embed.1}
  #allocation0 [shape = 'u32[]', space=smem, size = 0x4, offset = 0x4, fixed_abs, tag = 'smem constant byte address 0x4 - core index']
  #allocation1 [shape = 'u32[144,128]{1,0:T(1,128)}', space=vmem, size = 0x12000, scoped, tag = 'internal scratch']
  #allocation2 [shape = 'f32[32,512]{1,0:T(8,128)}', space=vmem, size = 0x10000, scoped, tag = 'scratch operand']
  %s0 = inlined_call_operand.vmem [shape: bf16[32,256], index: 0, kind: input, shape index: {}]
  %s1 = inlined_call_operand.vmem [shape: bf16[256,512], index: 1, kind: input, shape index: {}]
  %s2 = inlined_call_operand.vmem [shape: f32[1,512], index: 2, kind: input, shape index: {}]
  %s3 = inlined_call_operand.vmem [shape: bf16[32,512], index: 3, kind: output, shape index: {}]
  %s4 = sld [smem:[#allocation0]]
  $region30: #{_patch_embed.1} parent=0
    _
  %s6 = ssub.s32 1, %s4
  %s7 = scalar_select 0, %s6, %s4
  // Predicated region
  $region2: #{_patch_embed.1} parent=0 // pred_check
    _
  $region3: #{_patch_embed.1} parent=0 // pred_check_branch
    %9 = sbr.rel (0) target = $region5
  $region4: #{_patch_embed.1} parent=0 // pred_region
    _
  $region5: #{_patch_embed.1} parent=0 // pred_fallthru
    _
  // Predicated region
  $region6: #{_patch_embed.1} parent=0 // pred_check
    _
  $region7: #{_patch_embed.1} parent=0 // pred_check_branch
    %11 = sbr.rel (0) target = $region9
  $region8: #{_patch_embed.1} parent=0 // pred_region
    _
  $region9: #{_patch_embed.1} parent=0 // pred_fallthru
    _
  // Predicated region
  $region10: #{_patch_embed.1} parent=0 // pred_check
    _
  $region11: #{_patch_embed.1} parent=0 // pred_check_branch
    %13 = sbr.rel (0) target = $region13
  $region12: #{_patch_embed.1} parent=0 // pred_region
    _
  $region13: #{_patch_embed.1} parent=0 // pred_fallthru
    _
  %p14 = scmp.eq.s32.totalorder 0, 0
  // Predicated region
  $region14: #{_patch_embed.1} parent=0 // pred_check
    %p15 = pneg %p14
  $region15: #{_patch_embed.1} parent=0 // pred_check_branch
    %17 = sbr.rel (%p15) target = $region17
  $region16: #{_patch_embed.1} parent=0 // pred_region
    %18 = vst [vmem:[#allocation2] sm:$0xff] 0.0
    %19 = vst [vmem:[#allocation2 + $0x8] sm:$0xff] 0.0
    %20 = vst [vmem:[#allocation2 + $0x10] sm:$0xff] 0.0
    %21 = vst [vmem:[#allocation2 + $0x18] sm:$0xff] 0.0
    %22 = vst [vmem:[#allocation2 + $0x20] sm:$0xff] 0.0
    %23 = vst [vmem:[#allocation2 + $0x28] sm:$0xff] 0.0
    %24 = vst [vmem:[#allocation2 + $0x30] sm:$0xff] 0.0
    %25 = vst [vmem:[#allocation2 + $0x38] sm:$0xff] 0.0
    %26 = vst [vmem:[#allocation2 + $0x40] sm:$0xff] 0.0
    %27 = vst [vmem:[#allocation2 + $0x48] sm:$0xff] 0.0
    %28 = vst [vmem:[#allocation2 + $0x50] sm:$0xff] 0.0
    %29 = vst [vmem:[#allocation2 + $0x58] sm:$0xff] 0.0
    %30 = vst [vmem:[#allocation2 + $0x60] sm:$0xff] 0.0
    %31 = vst [vmem:[#allocation2 + $0x68] sm:$0xff] 0.0
    %32 = vst [vmem:[#allocation2 + $0x70] sm:$0xff] 0.0
    %33 = vst [vmem:[#allocation2 + $0x78] sm:$0xff] 0.0
  $region17: #{_patch_embed.1} parent=0 // pred_fallthru
    _
  %v34 = vld [vmem:[#allocation2] sm:$0xff]
  %v35 = vld [vmem:[#allocation2 + $0x8] sm:$0xff]
  %v36 = vld [vmem:[#allocation2 + $0x10] sm:$0xff]
  %v37 = vld [vmem:[#allocation2 + $0x18] sm:$0xff]
  %v38 = vld [vmem:[#allocation2 + $0x20] sm:$0xff]
  %v39 = vld [vmem:[#allocation2 + $0x28] sm:$0xff]
  %v40 = vld [vmem:[#allocation2 + $0x30] sm:$0xff]
  %v41 = vld [vmem:[#allocation2 + $0x38] sm:$0xff]
  %v42 = vld [vmem:[#allocation2 + $0x40] sm:$0xff]
  %v43 = vld [vmem:[#allocation2 + $0x48] sm:$0xff]
  %v44 = vld [vmem:[#allocation2 + $0x50] sm:$0xff]
  %v45 = vld [vmem:[#allocation2 + $0x58] sm:$0xff]
  %v46 = vld [vmem:[#allocation2 + $0x60] sm:$0xff]
  %v47 = vld [vmem:[#allocation2 + $0x68] sm:$0xff]
  %v48 = vld [vmem:[#allocation2 + $0x70] sm:$0xff]
  %v49 = vld [vmem:[#allocation2 + $0x78] sm:$0xff]
  %v50 = vld [vmem:[%s0] sm:$0xff]
  %v51 = vld [vmem:[%s0 + $0x8] sm:$0xff]
  %v52 = vld [vmem:[%s0 + $0x10] sm:$0xff]
  %v53 = vld [vmem:[%s0 + $0x18] sm:$0xff]
  %v54 = vld [vmem:[%s1] sm:$0xff]
  %v55 = vld [vmem:[%s1 + $0x8] sm:$0xff]
  %v56 = vld [vmem:[%s1 + $0x10] sm:$0xff]
  %v57 = vld [vmem:[%s1 + $0x18] sm:$0xff]
  %v58 = vld [vmem:[%s1 + $0x20] sm:$0xff]
  %v59 = vld [vmem:[%s1 + $0x28] sm:$0xff]
  %v60 = vld [vmem:[%s1 + $0x30] sm:$0xff]
  %v61 = vld [vmem:[%s1 + $0x38] sm:$0xff]
  %v62 = vld [vmem:[%s1 + $0x40] sm:$0xff]
  %v63 = vld [vmem:[%s1 + $0x48] sm:$0xff]
  %v64 = vld [vmem:[%s1 + $0x50] sm:$0xff]
  %v65 = vld [vmem:[%s1 + $0x58] sm:$0xff]
  %v66 = vld [vmem:[%s1 + $0x60] sm:$0xff]
  %v67 = vld [vmem:[%s1 + $0x68] sm:$0xff]
  %v68 = vld [vmem:[%s1 + $0x70] sm:$0xff]
  %v69 = vld [vmem:[%s1 + $0x78] sm:$0xff]
  %v70 = vld [vmem:[%s1 + $0x80] sm:$0xff]
  %v71 = vld [vmem:[%s1 + $0x88] sm:$0xff]
  %v72 = vld [vmem:[%s1 + $0x90] sm:$0xff]
  %v73 = vld [vmem:[%s1 + $0x98] sm:$0xff]
  %v74 = vld [vmem:[%s1 + $0xa0] sm:$0xff]
  %v75 = vld [vmem:[%s1 + $0xa8] sm:$0xff]
  %v76 = vld [vmem:[%s1 + $0xb0] sm:$0xff]
  %v77 = vld [vmem:[%s1 + $0xb8] sm:$0xff]
  %v78 = vld [vmem:[%s1 + $0xc0] sm:$0xff]
  %v79 = vld [vmem:[%s1 + $0xc8] sm:$0xff]
  %v80 = vld [vmem:[%s1 + $0xd0] sm:$0xff]
  %v81 = vld [vmem:[%s1 + $0xd8] sm:$0xff]
  %v82 = vld [vmem:[%s1 + $0xe0] sm:$0xff]
  %v83 = vld [vmem:[%s1 + $0xe8] sm:$0xff]
  %v84 = vld [vmem:[%s1 + $0xf0] sm:$0xff]
  %v85 = vld [vmem:[%s1 + $0xf8] sm:$0xff]
  %v86 = vld [vmem:[%s1 + $0x100] sm:$0xff]
  %v87 = vld [vmem:[%s1 + $0x108] sm:$0xff]
  %v88 = vld [vmem:[%s1 + $0x110] sm:$0xff]
  %v89 = vld [vmem:[%s1 + $0x118] sm:$0xff]
  %v90 = vld [vmem:[%s1 + $0x120] sm:$0xff]
  %v91 = vld [vmem:[%s1 + $0x128] sm:$0xff]
  %v92 = vld [vmem:[%s1 + $0x130] sm:$0xff]
  %v93 = vld [vmem:[%s1 + $0x138] sm:$0xff]
  %v94 = vld [vmem:[%s1 + $0x140] sm:$0xff]
  %v95 = vld [vmem:[%s1 + $0x148] sm:$0xff]
  %v96 = vld [vmem:[%s1 + $0x150] sm:$0xff]
  %v97 = vld [vmem:[%s1 + $0x158] sm:$0xff]
  %v98 = vld [vmem:[%s1 + $0x160] sm:$0xff]
  %v99 = vld [vmem:[%s1 + $0x168] sm:$0xff]
  %v100 = vld [vmem:[%s1 + $0x170] sm:$0xff]
  %v101 = vld [vmem:[%s1 + $0x178] sm:$0xff]
  %v102 = vld [vmem:[%s1 + $0x180] sm:$0xff]
  %v103 = vld [vmem:[%s1 + $0x188] sm:$0xff]
  %v104 = vld [vmem:[%s1 + $0x190] sm:$0xff]
  %v105 = vld [vmem:[%s1 + $0x198] sm:$0xff]
  %v106 = vld [vmem:[%s1 + $0x1a0] sm:$0xff]
  %v107 = vld [vmem:[%s1 + $0x1a8] sm:$0xff]
  %v108 = vld [vmem:[%s1 + $0x1b0] sm:$0xff]
  %v109 = vld [vmem:[%s1 + $0x1b8] sm:$0xff]
  %v110 = vld [vmem:[%s1 + $0x1c0] sm:$0xff]
  %v111 = vld [vmem:[%s1 + $0x1c8] sm:$0xff]
  %v112 = vld [vmem:[%s1 + $0x1d0] sm:$0xff]
  %v113 = vld [vmem:[%s1 + $0x1d8] sm:$0xff]
  %v114 = vld [vmem:[%s1 + $0x1e0] sm:$0xff]
  %v115 = vld [vmem:[%s1 + $0x1e8] sm:$0xff]
  %v116 = vld [vmem:[%s1 + $0x1f0] sm:$0xff]
  %v117 = vld [vmem:[%s1 + $0x1f8] sm:$0xff]
  %v122 = vunpack.c.l.b16 %v50
  %v123 = vunpack.c.h.b16 %v50
  %v124 = vunpack.c.l.b16 %v51
  %v125 = vunpack.c.h.b16 %v51
  %v126 = vunpack.c.l.b16 %v52
  %v127 = vunpack.c.h.b16 %v52
  %v128 = vunpack.c.l.b16 %v53
  %v129 = vunpack.c.h.b16 %v53
  %v130 = vpack.c.b16 %v124, %v122
  %v131 = vpack.c.b16 %v125, %v123
  %v132 = vpack.c.b16 %v128, %v126
  %v133 = vpack.c.b16 %v129, %v127
  %v202 = vunpack.c.l.b16 %v54
  %v203 = vunpack.c.h.b16 %v54
  %v204 = vunpack.c.l.b16 %v55
  %v205 = vunpack.c.h.b16 %v55
  %v206 = vunpack.c.l.b16 %v56
  %v207 = vunpack.c.h.b16 %v56
  %v208 = vunpack.c.l.b16 %v57
  %v209 = vunpack.c.h.b16 %v57
  %v210 = vunpack.c.l.b16 %v58
  %v211 = vunpack.c.h.b16 %v58
  %v212 = vunpack.c.l.b16 %v59
  %v213 = vunpack.c.h.b16 %v59
  %v214 = vunpack.c.l.b16 %v60
  %v215 = vunpack.c.h.b16 %v60
  %v216 = vunpack.c.l.b16 %v61
  %v217 = vunpack.c.h.b16 %v61
  %v218 = vunpack.c.l.b16 %v62
  %v219 = vunpack.c.h.b16 %v62
  %v220 = vunpack.c.l.b16 %v63
  %v221 = vunpack.c.h.b16 %v63
  %v222 = vunpack.c.l.b16 %v64
  %v223 = vunpack.c.h.b16 %v64
  %v224 = vunpack.c.l.b16 %v65
  %v225 = vunpack.c.h.b16 %v65
  %v226 = vunpack.c.l.b16 %v66
  %v227 = vunpack.c.h.b16 %v66
  %v228 = vunpack.c.l.b16 %v67
  %v229 = vunpack.c.h.b16 %v67
  %v230 = vunpack.c.l.b16 %v68
  %v231 = vunpack.c.h.b16 %v68
  %v232 = vunpack.c.l.b16 %v69
  %v233 = vunpack.c.h.b16 %v69
  %v234 = vunpack.c.l.b16 %v70
  %v235 = vunpack.c.h.b16 %v70
  %v236 = vunpack.c.l.b16 %v71
  %v237 = vunpack.c.h.b16 %v71
  %v238 = vunpack.c.l.b16 %v72
  %v239 = vunpack.c.h.b16 %v72
  %v240 = vunpack.c.l.b16 %v73
  %v241 = vunpack.c.h.b16 %v73
  %v242 = vunpack.c.l.b16 %v74
  %v243 = vunpack.c.h.b16 %v74
  %v244 = vunpack.c.l.b16 %v75
  %v245 = vunpack.c.h.b16 %v75
  %v246 = vunpack.c.l.b16 %v76
  %v247 = vunpack.c.h.b16 %v76
  %v248 = vunpack.c.l.b16 %v77
  %v249 = vunpack.c.h.b16 %v77
  %v250 = vunpack.c.l.b16 %v78
  %v251 = vunpack.c.h.b16 %v78
  %v252 = vunpack.c.l.b16 %v79
  %v253 = vunpack.c.h.b16 %v79
  %v254 = vunpack.c.l.b16 %v80
  %v255 = vunpack.c.h.b16 %v80
  %v256 = vunpack.c.l.b16 %v81
  %v257 = vunpack.c.h.b16 %v81
  %v258 = vunpack.c.l.b16 %v82
  %v259 = vunpack.c.h.b16 %v82
  %v260 = vunpack.c.l.b16 %v83
  %v261 = vunpack.c.h.b16 %v83
  %v262 = vunpack.c.l.b16 %v84
  %v263 = vunpack.c.h.b16 %v84
  %v264 = vunpack.c.l.b16 %v85
  %v265 = vunpack.c.h.b16 %v85
  %v266 = vunpack.c.l.b16 %v86
  %v267 = vunpack.c.h.b16 %v86
  %v268 = vunpack.c.l.b16 %v87
  %v269 = vunpack.c.h.b16 %v87
  %v270 = vunpack.c.l.b16 %v88
  %v271 = vunpack.c.h.b16 %v88
  %v272 = vunpack.c.l.b16 %v89
  %v273 = vunpack.c.h.b16 %v89
  %v274 = vunpack.c.l.b16 %v90
  %v275 = vunpack.c.h.b16 %v90
  %v276 = vunpack.c.l.b16 %v91
  %v277 = vunpack.c.h.b16 %v91
  %v278 = vunpack.c.l.b16 %v92
  %v279 = vunpack.c.h.b16 %v92
  %v280 = vunpack.c.l.b16 %v93
  %v281 = vunpack.c.h.b16 %v93
  %v282 = vunpack.c.l.b16 %v94
  %v283 = vunpack.c.h.b16 %v94
  %v284 = vunpack.c.l.b16 %v95
  %v285 = vunpack.c.h.b16 %v95
  %v286 = vunpack.c.l.b16 %v96
  %v287 = vunpack.c.h.b16 %v96
  %v288 = vunpack.c.l.b16 %v97
  %v289 = vunpack.c.h.b16 %v97
  %v290 = vunpack.c.l.b16 %v98
  %v291 = vunpack.c.h.b16 %v98
  %v292 = vunpack.c.l.b16 %v99
  %v293 = vunpack.c.h.b16 %v99
  %v294 = vunpack.c.l.b16 %v100
  %v295 = vunpack.c.h.b16 %v100
  %v296 = vunpack.c.l.b16 %v101
  %v297 = vunpack.c.h.b16 %v101
  %v298 = vunpack.c.l.b16 %v102
  %v299 = vunpack.c.h.b16 %v102
  %v300 = vunpack.c.l.b16 %v103
  %v301 = vunpack.c.h.b16 %v103
  %v302 = vunpack.c.l.b16 %v104
  %v303 = vunpack.c.h.b16 %v104
  %v304 = vunpack.c.l.b16 %v105
  %v305 = vunpack.c.h.b16 %v105
  %v306 = vunpack.c.l.b16 %v106
  %v307 = vunpack.c.h.b16 %v106
  %v308 = vunpack.c.l.b16 %v107
  %v309 = vunpack.c.h.b16 %v107
  %v310 = vunpack.c.l.b16 %v108
  %v311 = vunpack.c.h.b16 %v108
  %v312 = vunpack.c.l.b16 %v109
  %v313 = vunpack.c.h.b16 %v109
  %v314 = vunpack.c.l.b16 %v110
  %v315 = vunpack.c.h.b16 %v110
  %v316 = vunpack.c.l.b16 %v111
  %v317 = vunpack.c.h.b16 %v111
  %v318 = vunpack.c.l.b16 %v112
  %v319 = vunpack.c.h.b16 %v112
  %v320 = vunpack.c.l.b16 %v113
  %v321 = vunpack.c.h.b16 %v113
  %v322 = vunpack.c.l.b16 %v114
  %v323 = vunpack.c.h.b16 %v114
  %v324 = vunpack.c.l.b16 %v115
  %v325 = vunpack.c.h.b16 %v115
  %v326 = vunpack.c.l.b16 %v116
  %v327 = vunpack.c.h.b16 %v116
  %v328 = vunpack.c.l.b16 %v117
  %v329 = vunpack.c.h.b16 %v117
  %v330 = vpack.c.b16 %v206, %v202
  %v331 = vpack.c.b16 %v207, %v203
  %v332 = vpack.c.b16 %v208, %v204
  %v333 = vpack.c.b16 %v209, %v205
  %v334 = vpack.c.b16 %v214, %v210
  %v335 = vpack.c.b16 %v215, %v211
  %v336 = vpack.c.b16 %v216, %v212
  %v337 = vpack.c.b16 %v217, %v213
  %v338 = vpack.c.b16 %v222, %v218
  %v339 = vpack.c.b16 %v223, %v219
  %v340 = vpack.c.b16 %v224, %v220
  %v341 = vpack.c.b16 %v225, %v221
  %v342 = vpack.c.b16 %v230, %v226
  %v343 = vpack.c.b16 %v231, %v227
  %v344 = vpack.c.b16 %v232, %v228
  %v345 = vpack.c.b16 %v233, %v229
  %v346 = vpack.c.b16 %v238, %v234
  %v347 = vpack.c.b16 %v239, %v235
  %v348 = vpack.c.b16 %v240, %v236
  %v349 = vpack.c.b16 %v241, %v237
  %v350 = vpack.c.b16 %v246, %v242
  %v351 = vpack.c.b16 %v247, %v243
  %v352 = vpack.c.b16 %v248, %v244
  %v353 = vpack.c.b16 %v249, %v245
  %v354 = vpack.c.b16 %v254, %v250
  %v355 = vpack.c.b16 %v255, %v251
  %v356 = vpack.c.b16 %v256, %v252
  %v357 = vpack.c.b16 %v257, %v253
  %v358 = vpack.c.b16 %v262, %v258
  %v359 = vpack.c.b16 %v263, %v259
  %v360 = vpack.c.b16 %v264, %v260
  %v361 = vpack.c.b16 %v265, %v261
  %v362 = vpack.c.b16 %v270, %v266
  %v363 = vpack.c.b16 %v271, %v267
  %v364 = vpack.c.b16 %v272, %v268
  %v365 = vpack.c.b16 %v273, %v269
  %v366 = vpack.c.b16 %v278, %v274
  %v367 = vpack.c.b16 %v279, %v275
  %v368 = vpack.c.b16 %v280, %v276
  %v369 = vpack.c.b16 %v281, %v277
  %v370 = vpack.c.b16 %v286, %v282
  %v371 = vpack.c.b16 %v287, %v283
  %v372 = vpack.c.b16 %v288, %v284
  %v373 = vpack.c.b16 %v289, %v285
  %v374 = vpack.c.b16 %v294, %v290
  %v375 = vpack.c.b16 %v295, %v291
  %v376 = vpack.c.b16 %v296, %v292
  %v377 = vpack.c.b16 %v297, %v293
  %v378 = vpack.c.b16 %v302, %v298
  %v379 = vpack.c.b16 %v303, %v299
  %v380 = vpack.c.b16 %v304, %v300
  %v381 = vpack.c.b16 %v305, %v301
  %v382 = vpack.c.b16 %v310, %v306
  %v383 = vpack.c.b16 %v311, %v307
  %v384 = vpack.c.b16 %v312, %v308
  %v385 = vpack.c.b16 %v313, %v309
  %v386 = vpack.c.b16 %v318, %v314
  %v387 = vpack.c.b16 %v319, %v315
  %v388 = vpack.c.b16 %v320, %v316
  %v389 = vpack.c.b16 %v321, %v317
  %v390 = vpack.c.b16 %v326, %v322
  %v391 = vpack.c.b16 %v327, %v323
  %v392 = vpack.c.b16 %v328, %v324
  %v393 = vpack.c.b16 %v329, %v325
  %458 = vmatprep.subr.bf16.mxu0 %v359
  %459 = vmatpush1.bf16.msra.mxu0 %v358
  %460 = vmatprep.subr.bf16.mxu0 %v355
  %461 = vmatpush1.bf16.msra.mxu0 %v354
  %462 = vmatprep.subr.bf16.mxu0 %v351
  %463 = vmatpush1.bf16.msra.mxu0 %v350
  %464 = vmatprep.subr.bf16.mxu0 %v347
  %465 = vmatpush1.bf16.msra.mxu0 %v346
  %466 = vmatprep.subr.bf16.mxu0 %v343
  %467 = vmatpush1.bf16.msra.mxu0 %v342
  %468 = vmatprep.subr.bf16.mxu0 %v339
  %469 = vmatpush1.bf16.msra.mxu0 %v338
  %470 = vmatprep.subr.bf16.mxu0 %v335
  %471 = vmatpush1.bf16.msra.mxu0 %v334
  %472 = vmatprep.subr.bf16.mxu0 %v331
  %473 = vmatpush1.bf16.msra.mxu0 %v330
  %474 = vmatprep.subr.bf16.mxu0 %v391
  %475 = vmatpush2.bf16.msra.mxu0 %v390
  %476 = vmatprep.subr.bf16.mxu0 %v387
  %477 = vmatpush2.bf16.msra.mxu0 %v386
  %478 = vmatprep.subr.bf16.mxu0 %v383
  %479 = vmatpush2.bf16.msra.mxu0 %v382
  %480 = vmatprep.subr.bf16.mxu0 %v379
  %481 = vmatpush2.bf16.msra.mxu0 %v378
  %482 = vmatprep.subr.bf16.mxu0 %v375
  %483 = vmatpush2.bf16.msra.mxu0 %v374
  %484 = vmatprep.subr.bf16.mxu0 %v371
  %485 = vmatpush2.bf16.msra.mxu0 %v370
  %486 = vmatprep.subr.bf16.mxu0 %v367
  %487 = vmatpush2.bf16.msra.mxu0 %v366
  %488 = vmatprep.subr.bf16.mxu0 %v363
  %489 = vmatpush2.bf16.msra.mxu0 %v362
  %490 = vmatprep.mubr.bf16.mxu0 %v131
  %491 = vmatmul.mubr.bf16.gmra.mxu0 %v130
  %v492 = vpop.f32.mrf.mxu0
  %v493 = vadd.f32 0.0, %v492
  %v494 = vpop.f32.mrf.mxu0
  %v495 = vadd.f32 0.0, %v494
  %v496 = vpop.f32.mrf.mxu0
  %v497 = vadd.f32 0.0, %v496
  %v498 = vpop.f32.mrf.mxu0
  %v499 = vadd.f32 0.0, %v498
  %500 = vmatprep.mubr.bf16.mxu0 %v133
  %501 = vmatmul.mubr.bf16.gmra.mxu0 %v132
  %v502 = vpop.f32.mrf.mxu0
  %v503 = vadd.f32 0.0, %v502
  %v504 = vpop.f32.mrf.mxu0
  %v505 = vadd.f32 0.0, %v504
  %v506 = vpop.f32.mrf.mxu0
  %v507 = vadd.f32 0.0, %v506
  %v508 = vpop.f32.mrf.mxu0
  %v509 = vadd.f32 0.0, %v508
  %510 = vdwg.mxu0
  %511 = vmatprep.subr.bf16.mxu0 %v361
  %512 = vmatpush1.bf16.msra.mxu0 %v360
  %513 = vmatprep.subr.bf16.mxu0 %v357
  %514 = vmatpush1.bf16.msra.mxu0 %v356
  %515 = vmatprep.subr.bf16.mxu0 %v353
  %516 = vmatpush1.bf16.msra.mxu0 %v352
  %517 = vmatprep.subr.bf16.mxu0 %v349
  %518 = vmatpush1.bf16.msra.mxu0 %v348
  %519 = vmatprep.subr.bf16.mxu0 %v345
  %520 = vmatpush1.bf16.msra.mxu0 %v344
  %521 = vmatprep.subr.bf16.mxu0 %v341
  %522 = vmatpush1.bf16.msra.mxu0 %v340
  %523 = vmatprep.subr.bf16.mxu0 %v337
  %524 = vmatpush1.bf16.msra.mxu0 %v336
  %525 = vmatprep.subr.bf16.mxu0 %v333
  %526 = vmatpush1.bf16.msra.mxu0 %v332
  %527 = vmatprep.subr.bf16.mxu0 %v393
  %528 = vmatpush2.bf16.msra.mxu0 %v392
  %529 = vmatprep.subr.bf16.mxu0 %v389
  %530 = vmatpush2.bf16.msra.mxu0 %v388
  %531 = vmatprep.subr.bf16.mxu0 %v385
  %532 = vmatpush2.bf16.msra.mxu0 %v384
  %533 = vmatprep.subr.bf16.mxu0 %v381
  %534 = vmatpush2.bf16.msra.mxu0 %v380
  %535 = vmatprep.subr.bf16.mxu0 %v377
  %536 = vmatpush2.bf16.msra.mxu0 %v376
  %537 = vmatprep.subr.bf16.mxu0 %v373
  %538 = vmatpush2.bf16.msra.mxu0 %v372
  %539 = vmatprep.subr.bf16.mxu0 %v369
  %540 = vmatpush2.bf16.msra.mxu0 %v368
  %541 = vmatprep.subr.bf16.mxu0 %v365
  %542 = vmatpush2.bf16.msra.mxu0 %v364
  %543 = vmatprep.mubr.bf16.mxu0 %v131
  %544 = vmatmul.mubr.bf16.gmra.mxu0 %v130
  %v545 = vpop.f32.mrf.mxu0
  %v546 = vadd.f32 0.0, %v545
  %v547 = vpop.f32.mrf.mxu0
  %v548 = vadd.f32 0.0, %v547
  %v549 = vpop.f32.mrf.mxu0
  %v550 = vadd.f32 0.0, %v549
  %v551 = vpop.f32.mrf.mxu0
  %v552 = vadd.f32 0.0, %v551
  %553 = vmatprep.mubr.bf16.mxu0 %v133
  %554 = vmatmul.mubr.bf16.gmra.mxu0 %v132
  %v555 = vpop.f32.mrf.mxu0
  %v556 = vadd.f32 0.0, %v555
  %v557 = vpop.f32.mrf.mxu0
  %v558 = vadd.f32 0.0, %v557
  %v559 = vpop.f32.mrf.mxu0
  %v560 = vadd.f32 0.0, %v559
  %v561 = vpop.f32.mrf.mxu0
  %v562 = vadd.f32 0.0, %v561
  %563 = vdwg.mxu0
  %v564 = vadd.f32 %v34, %v493
  %v565 = vadd.f32 %v35, %v495
  %v566 = vadd.f32 %v36, %v546
  %v567 = vadd.f32 %v37, %v548
  %v568 = vadd.f32 %v38, %v497
  %v569 = vadd.f32 %v39, %v499
  %v570 = vadd.f32 %v40, %v550
  %v571 = vadd.f32 %v41, %v552
  %v572 = vadd.f32 %v42, %v503
  %v573 = vadd.f32 %v43, %v505
  %v574 = vadd.f32 %v44, %v556
  %v575 = vadd.f32 %v45, %v558
  %v576 = vadd.f32 %v46, %v507
  %v577 = vadd.f32 %v47, %v509
  %v578 = vadd.f32 %v48, %v560
  %v579 = vadd.f32 %v49, %v562
  %580 = vst [vmem:[#allocation2] sm:$0xff] %v564
  %581 = vst [vmem:[#allocation2 + $0x8] sm:$0xff] %v565
  %582 = vst [vmem:[#allocation2 + $0x10] sm:$0xff] %v566
  %583 = vst [vmem:[#allocation2 + $0x18] sm:$0xff] %v567
  %584 = vst [vmem:[#allocation2 + $0x20] sm:$0xff] %v568
  %585 = vst [vmem:[#allocation2 + $0x28] sm:$0xff] %v569
  %586 = vst [vmem:[#allocation2 + $0x30] sm:$0xff] %v570
  %587 = vst [vmem:[#allocation2 + $0x38] sm:$0xff] %v571
  %588 = vst [vmem:[#allocation2 + $0x40] sm:$0xff] %v572
  %589 = vst [vmem:[#allocation2 + $0x48] sm:$0xff] %v573
  %590 = vst [vmem:[#allocation2 + $0x50] sm:$0xff] %v574
  %591 = vst [vmem:[#allocation2 + $0x58] sm:$0xff] %v575
  %592 = vst [vmem:[#allocation2 + $0x60] sm:$0xff] %v576
  %593 = vst [vmem:[#allocation2 + $0x68] sm:$0xff] %v577
  %594 = vst [vmem:[#allocation2 + $0x70] sm:$0xff] %v578
  %595 = vst [vmem:[#allocation2 + $0x78] sm:$0xff] %v579
  // Predicated region
  $region18: #{_patch_embed.1} parent=0 // pred_check
    %p596 = pneg %p14
  $region19: #{_patch_embed.1} parent=0 // pred_check_branch
    %598 = sbr.rel (%p596) target = $region21
  $region20: #{_patch_embed.1} parent=0 // pred_region
    %v599 = vld [vmem:[#allocation2] sm:$0xff]
    %v600 = vld [vmem:[#allocation2 + $0x8] sm:$0xff]
    %v601 = vld [vmem:[#allocation2 + $0x10] sm:$0xff]
    %v602 = vld [vmem:[#allocation2 + $0x18] sm:$0xff]
    %v603 = vld [vmem:[#allocation2 + $0x20] sm:$0xff]
    %v604 = vld [vmem:[#allocation2 + $0x28] sm:$0xff]
    %v605 = vld [vmem:[#allocation2 + $0x30] sm:$0xff]
    %v606 = vld [vmem:[#allocation2 + $0x38] sm:$0xff]
    %v607 = vld [vmem:[#allocation2 + $0x40] sm:$0xff]
    %v608 = vld [vmem:[#allocation2 + $0x48] sm:$0xff]
    %v609 = vld [vmem:[#allocation2 + $0x50] sm:$0xff]
    %v610 = vld [vmem:[#allocation2 + $0x58] sm:$0xff]
    %v611 = vld [vmem:[#allocation2 + $0x60] sm:$0xff]
    %v612 = vld [vmem:[#allocation2 + $0x68] sm:$0xff]
    %v613 = vld [vmem:[#allocation2 + $0x70] sm:$0xff]
    %v614 = vld [vmem:[#allocation2 + $0x78] sm:$0xff]
    %v615 = vld [vmem:[%s2] sm:$0xf]
    %v617 = vlaneseq
    %v618 = vshrl.u32 %v617, 7
    %v619 = vsub.s32 0, %v618
    %v620 = vrot.slane %v615, %v619
    %v621 = vlaneseq
    %v622 = vshrl.u32 %v621, 7
    %v623 = vsub.s32 1, %v622
    %v624 = vrot.slane %v615, %v623
    %v625 = vlaneseq
    %v626 = vshrl.u32 %v625, 7
    %v627 = vsub.s32 2, %v626
    %v628 = vrot.slane %v615, %v627
    %v629 = vlaneseq
    %v630 = vshrl.u32 %v629, 7
    %v631 = vsub.s32 3, %v630
    %v632 = vrot.slane %v615, %v631
    %v637 = vadd.f32 %v599, %v620
    %v638 = vadd.f32 %v600, %v624
    %v639 = vadd.f32 %v601, %v628
    %v640 = vadd.f32 %v602, %v632
    %v641 = vadd.f32 %v603, %v620
    %v642 = vadd.f32 %v604, %v624
    %v643 = vadd.f32 %v605, %v628
    %v644 = vadd.f32 %v606, %v632
    %v645 = vadd.f32 %v607, %v620
    %v646 = vadd.f32 %v608, %v624
    %v647 = vadd.f32 %v609, %v628
    %v648 = vadd.f32 %v610, %v632
    %v649 = vadd.f32 %v611, %v620
    %v650 = vadd.f32 %v612, %v624
    %v651 = vadd.f32 %v613, %v628
    %v652 = vadd.f32 %v614, %v632
    %v653 = vpack.c.bf16 %v641, %v637
    %v654 = vpack.c.bf16 %v642, %v638
    %v655 = vpack.c.bf16 %v643, %v639
    %v656 = vpack.c.bf16 %v644, %v640
    %v657 = vpack.c.bf16 %v649, %v645
    %v658 = vpack.c.bf16 %v650, %v646
    %v659 = vpack.c.bf16 %v651, %v647
    %v660 = vpack.c.bf16 %v652, %v648
    %v669 = vunpack.c.l.b16 %v653
    %v670 = vunpack.c.l.b16 %v654
    %v671 = vunpack.c.l.b16 %v655
    %v672 = vunpack.c.l.b16 %v656
    %v673 = vunpack.c.h.b16 %v653
    %v674 = vunpack.c.h.b16 %v654
    %v675 = vunpack.c.h.b16 %v655
    %v676 = vunpack.c.h.b16 %v656
    %v677 = vunpack.c.l.b16 %v657
    %v678 = vunpack.c.l.b16 %v658
    %v679 = vunpack.c.l.b16 %v659
    %v680 = vunpack.c.l.b16 %v660
    %v681 = vunpack.c.h.b16 %v657
    %v682 = vunpack.c.h.b16 %v658
    %v683 = vunpack.c.h.b16 %v659
    %v684 = vunpack.c.h.b16 %v660
    %v685 = vpack.c.b16 %v670, %v669
    %v686 = vpack.c.b16 %v672, %v671
    %v687 = vpack.c.b16 %v674, %v673
    %v688 = vpack.c.b16 %v676, %v675
    %v689 = vpack.c.b16 %v678, %v677
    %v690 = vpack.c.b16 %v680, %v679
    %v691 = vpack.c.b16 %v682, %v681
    %v692 = vpack.c.b16 %v684, %v683
    %701 = vst [vmem:[%s3] sm:$0xff] %v685
    %702 = vst [vmem:[%s3 + $0x8] sm:$0xff] %v686
    %703 = vst [vmem:[%s3 + $0x10] sm:$0xff] %v687
    %704 = vst [vmem:[%s3 + $0x18] sm:$0xff] %v688
    %705 = vst [vmem:[%s3 + $0x20] sm:$0xff] %v689
    %706 = vst [vmem:[%s3 + $0x28] sm:$0xff] %v690
    %707 = vst [vmem:[%s3 + $0x30] sm:$0xff] %v691
    %708 = vst [vmem:[%s3 + $0x38] sm:$0xff] %v692
  $region21: #{_patch_embed.1} parent=0 // pred_fallthru
    _
  // Predicated region
  $region22: #{_patch_embed.1} parent=0 // pred_check
    _
  $region23: #{_patch_embed.1} parent=0 // pred_check_branch
    %710 = sbr.rel (0) target = $region25
  $region24: #{_patch_embed.1} parent=0 // pred_region
    _
  $region25: #{_patch_embed.1} parent=0 // pred_fallthru
    _
  // Predicated region
  $region26: #{_patch_embed.1} parent=0 // pred_check
    _
  $region27: #{_patch_embed.1} parent=0 // pred_check_branch
    %712 = sbr.rel (0) target = $region29
  $region28: #{_patch_embed.1} parent=0 // pred_region
    _
  $region29: #{_patch_embed.1} parent=0 // pred_fallthru
    _

</llo_original>
